<compile_context>
chip_gen: v7x
topology: tpu7x:2x2x1
jax: 0.10.0
libtpu: 0.0.40
codegen_flags: <defaults>
</compile_context>

<pallas_src>
import jax
import jax.numpy as jnp
from jax.experimental import pallas as pl
from jax.experimental.pallas import tpu as pltpu


def _value_kernel(xt_ref, w1_ref, w2_ref, misc_ref, o_ref):
    """Fused 3-layer MLP on one batch tile, batch on the lane axis.

    xt_ref  : (S,   TB)  bf16   x^T tile (batch on lanes / MXU N axis)
    w1_ref  : (H1,  S)   bf16   fc1 weight, PyTorch (out, in) orientation
    w2_ref  : (H2,  H1)  bf16   fc2 weight, PyTorch (out, in) orientation
    misc_ref: (Hmax, 4)  f32    col0 = b1, col1 = b2, col2 = w3 column, [0,3] = b3
    o_ref   : (1,   TB)  f32    lane-dense output row (unmasked stores)
    """
    h1_units = w1_ref.shape[0]
    h2_units = w2_ref.shape[0]

    b1 = misc_ref[:h1_units, 0:1]     # (H1, 1) broadcast over lanes
    b2 = misc_ref[:h2_units, 1:2]     # (H2, 1)
    w3 = misc_ref[:h2_units, 2:3]     # (H2, 1) fc3 weight column (kept f32)
    b3 = misc_ref[0:1, 3:4]           # (1, 1)

    # fc1 + relu: (H1, S) @ (S, TB) -> (H1, TB).  MXU, bf16 operands, f32 acc.
    h1t = jnp.dot(w1_ref[...], xt_ref[...], preferred_element_type=jnp.float32)
    h1t = jnp.maximum(h1t + b1, 0.0)                      # f32 VPU, lane-dense

    # fc2 + relu: (H2, H1) @ (H1, TB) -> (H2, TB).  Cast only the MXU operand.
    h2t = jnp.dot(w2_ref[...], h1t.astype(w2_ref.dtype),
                  preferred_element_type=jnp.float32)
    h2t = jnp.maximum(h2t + b2, 0.0)                      # f32 VPU, lane-dense

    # fc3 (output width 1): VPU multiply + sublane reduce -> already a
    # lane-dense (1, TB) row; skips the MXU push/pop for a width-1 tile and
    # needs no cross-lane relayout.
    o = jnp.sum(h2t * w3, axis=0, keepdims=True)          # (1, TB) f32
    o_ref[...] = (o + b3).astype(o_ref.dtype)


def pack_value_params(w1, b1, w2, b2, w3, b3):
    """Pack params into the kernel layout (call once, outside the hot loop).

    w1: (S, H1)  b1: (H1,)   w2: (H1, H2)  b2: (H2,)   w3: (H2, 1)  b3: (1,)
    Returns (w1_t bf16 (H1,S), w2_t bf16 (H2,H1), misc f32 (Hmax,4)).
    """
    h1 = w1.shape[1]
    h2 = w2.shape[1]
    hmax = max(h1, h2, 8)
    w1_t = jnp.asarray(w1, jnp.float32).T.astype(jnp.bfloat16)   # (H1, S)
    w2_t = jnp.asarray(w2, jnp.float32).T.astype(jnp.bfloat16)   # (H2, H1)
    misc = jnp.zeros((hmax, 4), jnp.float32)
    misc = misc.at[:h1, 0].set(jnp.reshape(b1, (-1,)).astype(jnp.float32))
    misc = misc.at[:h2, 1].set(jnp.reshape(b2, (-1,)).astype(jnp.float32))
    misc = misc.at[:h2, 2].set(jnp.reshape(w3, (-1,)).astype(jnp.float32))
    misc = misc.at[0, 3].set(jnp.reshape(b3, ()).astype(jnp.float32))
    return (w1_t, w2_t, misc)


_LANE = 128
_MAX_TB = 4096   # batch-tile cap (multiple of 128); VMEM-sanity only


def _round_up(v, m):
    return ((v + m - 1) // m) * m


@jax.jit
def value_forward(x, packed_params):
    """Fused 3-layer MLP.  x: (B, state_dim) f32  ->  (B,) f32."""
    w1_t, w2_t, misc = packed_params
    B, S = x.shape
    H1, _ = w1_t.shape
    H2, _ = w2_t.shape
    hmax = misc.shape[0]

    # One fused transpose + cast in XLA: batch lands on the MXU lane/N axis
    # and the only B-scaling HBM stream is halved to bf16.
    xt = x.T.astype(jnp.bfloat16)                      # (S, B)

    # Batch tile: full-extent for tiny B; otherwise split ~in half (128-aligned,
    # so edge stores stay unmasked and both v7x TensorCores get work), capped
    # at _MAX_TB so very large B amortizes the ~0.35 us/step grid overhead
    # without blowing VMEM.
    if B <= _LANE:
        TB = B
    else:
        TB = min(_MAX_TB, _round_up(pl.cdiv(B, 2), _LANE))
    grid = (pl.cdiv(B, TB),)

    const0 = lambda i: (0, 0)   # weights/biases: VMEM-resident, never re-indexed

    out = pl.pallas_call(
        _value_kernel,
        out_shape=jax.ShapeDtypeStruct((1, B), jnp.float32),
        grid=grid,
        in_specs=[
            pl.BlockSpec((S, TB), lambda i: (0, i)),    # x^T: tiled over batch lanes
            pl.BlockSpec((H1, S), const0),              # W1 (out, in)
            pl.BlockSpec((H2, H1), const0),             # W2 (out, in)
            pl.BlockSpec((hmax, 4), const0),            # packed b1|b2|w3|b3
        ],
        out_specs=pl.BlockSpec((1, TB), lambda i: (0, i)),
        compiler_params=pltpu.CompilerParams(
            dimension_semantics=("parallel",),          # shard batch across TCs (v7x)
        ),
    )(xt, w1_t, w2_t, misc)

    # Glue: (1, B) -> (B,), same as torch.reshape(x, (-1,))
    return out.reshape(-1)


def _reference_f32(x, w1, b1, w2, b2, w3, b3):
    """Exact torch-semantics reference (pure f32)."""
    r = jnp.maximum(x @ w1 + b1, 0.0)
    r = jnp.maximum(r @ w2 + b2, 0.0)
    return (r @ w3 + b3).reshape(-1)


def _reference_bf16_ops(x, w1, b1, w2, b2, w3, b3):
    """Reference mimicking the kernel's bf16 MXU operands + f32 accumulation."""
    bf = jnp.bfloat16
    h1 = jnp.dot(x.astype(bf), w1.astype(bf), preferred_element_type=jnp.float32)
    h1 = jnp.maximum(h1 + b1, 0.0)
    h2 = jnp.dot(h1.astype(bf), w2.astype(bf), preferred_element_type=jnp.float32)
    h2 = jnp.maximum(h2 + b2, 0.0)
    return (h2 @ w3 + b3).reshape(-1)


if __name__ == "__main__":
    # Module hyper-params (small, consistent with the forward pass)
    state_dim = 32
    hidden1 = 64
    hidden2 = 32
    batch = 8

    key = jax.random.PRNGKey(0)
    k_x, k_w1, k_b1, k_w2, k_b2, k_w3, k_b3, k_x2 = jax.random.split(key, 8)

    # Deterministic "initialize()": weights & biases ~ N(0, 0.01), like initWeights
    std = 0.01
    x = jax.random.normal(k_x, (batch, state_dim), dtype=jnp.float32)
    w1 = std * jax.random.normal(k_w1, (state_dim, hidden1), dtype=jnp.float32)
    b1 = std * jax.random.normal(k_b1, (hidden1,), dtype=jnp.float32)
    w2 = std * jax.random.normal(k_w2, (hidden1, hidden2), dtype=jnp.float32)
    b2 = std * jax.random.normal(k_b2, (hidden2,), dtype=jnp.float32)
    w3 = std * jax.random.normal(k_w3, (hidden2, 1), dtype=jnp.float32)
    b3 = std * jax.random.normal(k_b3, (1,), dtype=jnp.float32)

    params = pack_value_params(w1, b1, w2, b2, w3, b3)

    # Small batch (single full-extent tile)
    y = value_forward(x, params)
    jax.block_until_ready(y)
    assert y.shape == (batch,), y.shape
    ref_mix = _reference_bf16_ops(x, w1, b1, w2, b2, w3, b3)
    ref_f32 = _reference_f32(x, w1, b1, w2, b2, w3, b3)
    # Tight check vs. a reference using the same bf16-operand / f32-accumulate math.
    assert jnp.allclose(y, ref_mix, atol=1e-4, rtol=1e-3), float(
        jnp.max(jnp.abs(y - ref_mix))
    )
    # Loose semantic check vs. the pure-f32 torch-equivalent forward
    # (tolerance widened because the MXU operands are bf16; accumulation is f32).
    assert jnp.allclose(y, ref_f32, atol=2e-3, rtol=2e-2), float(
        jnp.max(jnp.abs(y - ref_f32))
    )

    # Larger batch: exercises the multi-tile grid + partial edge block path
    big_batch = 1041
    x_big = jax.random.normal(k_x2, (big_batch, state_dim), dtype=jnp.float32)
    y_big = value_forward(x_big, params)
    jax.block_until_ready(y_big)
    assert y_big.shape == (big_batch,), y_big.shape
    ref_mix_big = _reference_bf16_ops(x_big, w1, b1, w2, b2, w3, b3)
    ref_f32_big = _reference_f32(x_big, w1, b1, w2, b2, w3, b3)
    assert jnp.allclose(y_big, ref_mix_big, atol=1e-4, rtol=1e-3), float(
        jnp.max(jnp.abs(y_big - ref_mix_big))
    )
    assert jnp.allclose(y_big, ref_f32_big, atol=2e-3, rtol=2e-2), float(
        jnp.max(jnp.abs(y_big - ref_f32_big))
    )

    print("KERNEL_OK")
</pallas_src>

<mosaic_0001>
module attributes {stable_mosaic.version = 11 : i64} {
  func.func @_value_kernel(%arg0: i32, %arg1: memref<32x8xbf16, #tpu.memory_space<vmem>>, %arg2: memref<64x32xbf16, #tpu.memory_space<vmem>>, %arg3: memref<32x64xbf16, #tpu.memory_space<vmem>>, %arg4: memref<64x4xf32, #tpu.memory_space<vmem>>, %arg5: memref<1x8xf32, #tpu.memory_space<vmem>>) attributes {dimension_semantics = [#tpu.dimension_semantics<parallel>], iteration_bounds = array<i64: 1>, scalar_prefetch = 0 : i64, scratch_operands = 0 : i64, tpu.core_type = #tpu.core_type<tc>, window_params = [{transform_indices = @transform_0, window_bounds = array<i64: 32, 8>}, {pipeline_mode = #tpu.pipeline_mode<synchronous>, transform_indices = @transform_1, window_bounds = array<i64: 64, 32>}, {pipeline_mode = #tpu.pipeline_mode<synchronous>, transform_indices = @transform_2, window_bounds = array<i64: 32, 64>}, {pipeline_mode = #tpu.pipeline_mode<synchronous>, transform_indices = @transform_3, window_bounds = array<i64: 64, 4>}, {transform_indices = @transform_4, window_bounds = array<i64: 1, 8>}]} {
    %c0 = arith.constant 0 : index
    %c0_0 = arith.constant 0 : index
    %0 = vector.load %arg4[%c0, %c0_0] : memref<64x4xf32, #tpu.memory_space<vmem>>, vector<64x1xf32>
    %c0_1 = arith.constant 0 : index
    %c1 = arith.constant 1 : index
    %1 = vector.load %arg4[%c0_1, %c1] : memref<64x4xf32, #tpu.memory_space<vmem>>, vector<32x1xf32>
    %c0_2 = arith.constant 0 : index
    %c2 = arith.constant 2 : index
    %2 = vector.load %arg4[%c0_2, %c2] : memref<64x4xf32, #tpu.memory_space<vmem>>, vector<32x1xf32>
    %c0_3 = arith.constant 0 : index
    %c3 = arith.constant 3 : index
    %3 = vector.load %arg4[%c0_3, %c3] : memref<64x4xf32, #tpu.memory_space<vmem>>, vector<1x1xf32>
    %c0_4 = arith.constant 0 : index
    %c0_5 = arith.constant 0 : index
    %4 = vector.load %arg2[%c0_4, %c0_5] : memref<64x32xbf16, #tpu.memory_space<vmem>>, vector<64x32xbf16>
    %c0_6 = arith.constant 0 : index
    %c0_7 = arith.constant 0 : index
    %5 = vector.load %arg1[%c0_6, %c0_7] : memref<32x8xbf16, #tpu.memory_space<vmem>>, vector<32x8xbf16>
    %cst = arith.constant dense<0.000000e+00> : vector<64x8xf32>
    %6 = tpu.matmul %4, %5, %cst {dimension_numbers = #tpu.dot_dimension_numbers<[1], [0], [0], [1], [0, 0, 1, 1], [], []>} : vector<64x32xbf16>, vector<32x8xbf16>, vector<64x8xf32> -> vector<64x8xf32>
    %7 = vector.broadcast %0 : vector<64x1xf32> to vector<64x8xf32>
    %8 = arith.addf %6, %7 : vector<64x8xf32>
    %cst_8 = arith.constant 0.000000e+00 : f32
    %9 = vector.broadcast %cst_8 : f32 to vector<64x8xf32>
    %10 = arith.maximumf %8, %9 : vector<64x8xf32>
    %c0_9 = arith.constant 0 : index
    %c0_10 = arith.constant 0 : index
    %11 = vector.load %arg3[%c0_9, %c0_10] : memref<32x64xbf16, #tpu.memory_space<vmem>>, vector<32x64xbf16>
    %12 = arith.truncf %10 : vector<64x8xf32> to vector<64x8xbf16>
    %cst_11 = arith.constant dense<0.000000e+00> : vector<32x8xf32>
    %13 = tpu.matmul %11, %12, %cst_11 {dimension_numbers = #tpu.dot_dimension_numbers<[1], [0], [0], [1], [0, 0, 1, 1], [], []>} : vector<32x64xbf16>, vector<64x8xbf16>, vector<32x8xf32> -> vector<32x8xf32>
    %14 = vector.broadcast %1 : vector<32x1xf32> to vector<32x8xf32>
    %15 = arith.addf %13, %14 : vector<32x8xf32>
    %cst_12 = arith.constant 0.000000e+00 : f32
    %16 = vector.broadcast %cst_12 : f32 to vector<32x8xf32>
    %17 = arith.maximumf %15, %16 : vector<32x8xf32>
    %18 = vector.broadcast %2 : vector<32x1xf32> to vector<32x8xf32>
    %19 = arith.mulf %17, %18 : vector<32x8xf32>
    %cst_13 = arith.constant dense<0.000000e+00> : vector<8xf32>
    %20 = vector.multi_reduction <add>, %19, %cst_13 [0] : vector<32x8xf32> to vector<8xf32>
    %21 = vector.shape_cast %20 : vector<8xf32> to vector<1x8xf32>
    %22 = vector.broadcast %3 : vector<1x1xf32> to vector<1x8xf32>
    %23 = arith.addf %21, %22 : vector<1x8xf32>
    %c0_14 = arith.constant 0 : index
    %c0_15 = arith.constant 0 : index
    %24 = vector.load %arg5[%c0_14, %c0_15] : memref<1x8xf32, #tpu.memory_space<vmem>>, vector<1x8xf32>
    tpu.vector_store %arg5[%c0_14, %c0_15], %23 {strides = array<i32>} : memref<1x8xf32, #tpu.memory_space<vmem>>, vector<1x8xf32>,
    return
  }
  func.func @transform_0(%arg0: i32) -> (i32, i32) {
    %c0_i32 = arith.constant 0 : i32
    %c0_i32_0 = arith.constant 0 : i32
    return %c0_i32, %arg0 : i32, i32
  }
  func.func @transform_1(%arg0: i32) -> (i32, i32) {
    %c0_i32 = arith.constant 0 : i32
    %c0_i32_0 = arith.constant 0 : i32
    %c0_i32_1 = arith.constant 0 : i32
    return %c0_i32, %c0_i32_0 : i32, i32
  }
  func.func @transform_2(%arg0: i32) -> (i32, i32) {
    %c0_i32 = arith.constant 0 : i32
    %c0_i32_0 = arith.constant 0 : i32
    %c0_i32_1 = arith.constant 0 : i32
    return %c0_i32, %c0_i32_0 : i32, i32
  }
  func.func @transform_3(%arg0: i32) -> (i32, i32) {
    %c0_i32 = arith.constant 0 : i32
    %c0_i32_0 = arith.constant 0 : i32
    %c0_i32_1 = arith.constant 0 : i32
    return %c0_i32, %c0_i32_0 : i32, i32
  }
  func.func @transform_4(%arg0: i32) -> (i32, i32) {
    %c0_i32 = arith.constant 0 : i32
    %c0_i32_0 = arith.constant 0 : i32
    return %c0_i32, %arg0 : i32, i32
  }
}

</mosaic_0001>

<llo_original>
// kernel: value_forward.1
$region0: #{value_forward.1}
  #allocation0 [shape = 'u32[]', space=smem, size = 0x4, offset = 0x4, fixed_abs, tag = 'smem constant byte address 0x4 - core index']
  #allocation1 [shape = 'u32[144,128]{1,0:T(1,128)}', space=vmem, size = 0x12000, scoped, tag = 'internal scratch']
  %s0 = inlined_call_operand.vmem [shape: bf16[32,8], index: 0, kind: input, shape index: {}]
  %s1 = inlined_call_operand.vmem [shape: bf16[64,32], index: 1, kind: input, shape index: {}]
  %s2 = inlined_call_operand.vmem [shape: bf16[32,64], index: 2, kind: input, shape index: {}]
  %s3 = inlined_call_operand.vmem [shape: f32[64,4], index: 3, kind: input, shape index: {}]
  %s4 = inlined_call_operand.hbm [shape: f32[1,8], index: 4, kind: output, shape index: {}]
  %s5 = sld [smem:[#allocation0]]
  $region26: #{value_forward.1} parent=0
    _
  %s7 = ssub.s32 1, %s5
  %s8 = scalar_select 0, %s7, %s5
  $region1: #{value_forward.1} parent=0
    #allocation2 [shape = 'u8[512]{0}', space=vmem, size = 0x400, scoped, tag = 'output window, operand 0, single buffered']
    #allocation3 [shape = 's32[1]{0}', space=sflag, size = 0x4, scoped, tag = 'scoped memory for value_forward.1']
    %9 = vsyncpa [#allocation3], 0
    // Predicated region
    $region2: #{value_forward.1} parent=1 // pred_check
      _
    $region3: #{value_forward.1} parent=1 // pred_check_branch
      %11 = sbr.rel (0) target = $region5
    $region4: #{value_forward.1} parent=1 // pred_region
      _
    $region5: #{value_forward.1} parent=1 // pred_fallthru
      _
    // Predicated region
    $region6: #{value_forward.1} parent=1 // pred_check
      _
    $region7: #{value_forward.1} parent=1 // pred_check_branch
      %13 = sbr.rel (0) target = $region9
    $region8: #{value_forward.1} parent=1 // pred_region
      _
    $region9: #{value_forward.1} parent=1 // pred_fallthru
      _
    // Predicated region
    $region10: #{value_forward.1} parent=1 // pred_check
      _
    $region11: #{value_forward.1} parent=1 // pred_check_branch
      %15 = sbr.rel (0) target = $region13
    $region12: #{value_forward.1} parent=1 // pred_region
      _
    $region13: #{value_forward.1} parent=1 // pred_fallthru
      _
    // Predicated region
    $region14: #{value_forward.1} parent=1 // pred_check
      _
    $region15: #{value_forward.1} parent=1 // pred_check_branch
      %17 = sbr.rel (0) target = $region17
    $region16: #{value_forward.1} parent=1 // pred_region
      _
    $region17: #{value_forward.1} parent=1 // pred_fallthru
      _
    %v19 = vld [vmem:[%s3] sm:$0xff]
    %v20 = vld [vmem:[%s3 + $0x8] sm:$0xff]
    %v21 = vld [vmem:[%s3 + $0x10] sm:$0xff]
    %v22 = vld [vmem:[%s3 + $0x18] sm:$0xff]
    %v23 = vld [vmem:[%s3 + $0x20] sm:$0xff]
    %v24 = vld [vmem:[%s3 + $0x28] sm:$0xff]
    %v25 = vld [vmem:[%s3 + $0x30] sm:$0xff]
    %v26 = vld [vmem:[%s3 + $0x38] sm:$0xff]
    %v27 = vld [vmem:[%s3] sm:$0x1]
    %v28 = vld [vmem:[%s1] sm:$0xf]
    %v29 = vld [vmem:[%s1 + $0x4] sm:$0xf]
    %v30 = vld [vmem:[%s1 + $0x8] sm:$0xf]
    %v31 = vld [vmem:[%s1 + $0xc] sm:$0xf]
    %v32 = vld [vmem:[%s1 + $0x10] sm:$0xf]
    %v33 = vld [vmem:[%s1 + $0x14] sm:$0xf]
    %v34 = vld [vmem:[%s1 + $0x18] sm:$0xf]
    %v35 = vld [vmem:[%s1 + $0x1c] sm:$0xf]
    %v36 = vld [vmem:[%s0] sm:$0xf]
    %v37 = vld [vmem:[%s0 + $0x4] sm:$0xf]
    %v38 = vld [vmem:[%s0 + $0x8] sm:$0xf]
    %v39 = vld [vmem:[%s0 + $0xc] sm:$0xf]
    %41 = vset.pattern.permute.xlu0 0
    %42 = vperm.xlu0 %41, %v19
    %v43 = vpop.permute.xlu0 %42
    %46 = vset.pattern.permute.xlu0 0
    %47 = vperm.xlu0 %46, %v20
    %v48 = vpop.permute.xlu0 %47
    %51 = vset.pattern.permute.xlu0 0
    %52 = vperm.xlu0 %51, %v21
    %v53 = vpop.permute.xlu0 %52
    %56 = vset.pattern.permute.xlu0 0
    %57 = vperm.xlu0 %56, %v22
    %v58 = vpop.permute.xlu0 %57
    %61 = vset.pattern.permute.xlu0 0
    %62 = vperm.xlu0 %61, %v23
    %v63 = vpop.permute.xlu0 %62
    %66 = vset.pattern.permute.xlu0 0
    %67 = vperm.xlu0 %66, %v24
    %v68 = vpop.permute.xlu0 %67
    %71 = vset.pattern.permute.xlu0 0
    %72 = vperm.xlu0 %71, %v25
    %v73 = vpop.permute.xlu0 %72
    %76 = vset.pattern.permute.xlu0 0
    %77 = vperm.xlu0 %76, %v26
    %v78 = vpop.permute.xlu0 %77
    %v88 = vunpack.c.l.b16 %v28
    %v89 = vunpack.c.l.b16 %v29
    %v90 = vunpack.c.l.b16 %v30
    %v91 = vunpack.c.l.b16 %v31
    %v92 = vunpack.c.l.b16 %v32
    %v93 = vunpack.c.l.b16 %v33
    %v94 = vunpack.c.l.b16 %v34
    %v95 = vunpack.c.l.b16 %v35
    %v96 = vpack.c.b16 %v89, %v88
    %v97 = vpack.c.b16 %v91, %v90
    %v98 = vpack.c.b16 %v93, %v92
    %v99 = vpack.c.b16 %v95, %v94
    %v104 = vunpack.c.l.b16 %v36
    %v105 = vunpack.c.l.b16 %v37
    %v106 = vunpack.c.l.b16 %v38
    %v107 = vunpack.c.l.b16 %v39
    %v108 = vpack.c.b16 %v105, %v104
    %v109 = vpack.c.b16 %v107, %v106
    %vm112 = vcmask 261120
    %v114 = vsel %vm112, %v96, 0
    %v117 = vsel %vm112, %v97, 0
    %v120 = vsel %vm112, %v98, 0
    %v123 = vsel %vm112, %v99, 0
    %125 = vmatprep.subr.bf16.mxu0 0
    %126 = vmatpush1.bf16.msra.mxu0 %v108
    %127 = vmatprep.subr.bf16.mxu0 0
    %128 = vmatpush1.bf16.msra.mxu0 %v109
    %129 = vmatprep.subr.bf16.mxu0 0
    %130 = vmatpush1.bf16.msra.mxu0 0
    %131 = vmatprep.subr.bf16.mxu0 0
    %132 = vmatpush1.bf16.msra.mxu0 0
    %133 = vmatprep.subr.bf16.mxu0 0
    %134 = vmatpush1.bf16.msra.mxu0 0
    %135 = vmatprep.subr.bf16.mxu0 0
    %136 = vmatpush1.bf16.msra.mxu0 0
    %137 = vmatprep.subr.bf16.mxu0 0
    %138 = vmatpush1.bf16.msra.mxu0 0
    %139 = vmatprep.subr.bf16.mxu0 0
    %140 = vmatpush1.bf16.msra.mxu0 0
    %141 = vmatprep.subr.bf16.mxu0 0
    %142 = vmatpush1.bf16.msra.mxu0 0
    %143 = vmatprep.subr.bf16.mxu0 0
    %144 = vmatpush1.bf16.msra.mxu0 0
    %145 = vmatprep.subr.bf16.mxu0 0
    %146 = vmatpush1.bf16.msra.mxu0 0
    %147 = vmatprep.subr.bf16.mxu0 0
    %148 = vmatpush1.bf16.msra.mxu0 0
    %149 = vmatprep.subr.bf16.mxu0 0
    %150 = vmatpush1.bf16.msra.mxu0 0
    %151 = vmatprep.subr.bf16.mxu0 0
    %152 = vmatpush1.bf16.msra.mxu0 0
    %153 = vmatprep.subr.bf16.mxu0 0
    %154 = vmatpush1.bf16.msra.mxu0 0
    %155 = vmatprep.subr.bf16.mxu0 0
    %156 = vmatpush1.bf16.msra.mxu0 0
    %157 = vmatprep.mubr.bf16.mxu0 0
    %158 = vmatmul.mubr.bf16.gmra.mrb[0].mxu0 %v114
    %v159 = vpop.f32.mrb[0].mxu0
    %v160 = vadd.f32 %v43, %v159
    %v161 = vpop.f32.mrb[0].mxu0
    %v162 = vpop.f32.mrb[0].mxu0
    %v163 = vadd.f32 %v48, %v162
    %v164 = vpop.f32.mrb[0].mxu0
    %165 = vmatprep.mubr.bf16.mxu0 0
    %166 = vmatmul.mubr.bf16.gmra.mrb[0].mxu0 %v117
    %v167 = vpop.f32.mrb[0].mxu0
    %v168 = vadd.f32 %v53, %v167
    %v169 = vpop.f32.mrb[0].mxu0
    %v170 = vpop.f32.mrb[0].mxu0
    %v171 = vadd.f32 %v58, %v170
    %v172 = vpop.f32.mrb[0].mxu0
    %173 = vmatprep.mubr.bf16.mxu0 0
    %174 = vmatmul.mubr.bf16.gmra.mrb[0].mxu0 %v120
    %v175 = vpop.f32.mrb[0].mxu0
    %v176 = vadd.f32 %v63, %v175
    %v177 = vpop.f32.mrb[0].mxu0
    %v178 = vpop.f32.mrb[0].mxu0
    %v179 = vadd.f32 %v68, %v178
    %v180 = vpop.f32.mrb[0].mxu0
    %181 = vmatprep.mubr.bf16.mxu0 0
    %182 = vmatmul.mubr.bf16.gmra.mrb[0].mxu0 %v123
    %v183 = vpop.f32.mrb[0].mxu0
    %v184 = vadd.f32 %v73, %v183
    %v185 = vpop.f32.mrb[0].mxu0
    %v186 = vpop.f32.mrb[0].mxu0
    %v187 = vadd.f32 %v78, %v186
    %v188 = vpop.f32.mrb[0].mxu0
    %189 = vdwg.mxu0
    %v190 = vmax.f32 %v160, 0.0
    %v191 = vmax.f32 %v163, 0.0
    %v192 = vmax.f32 %v168, 0.0
    %v193 = vmax.f32 %v171, 0.0
    %v194 = vmax.f32 %v176, 0.0
    %v195 = vmax.f32 %v179, 0.0
    %v196 = vmax.f32 %v184, 0.0
    %v197 = vmax.f32 %v187, 0.0
    %v198 = vld [vmem:[%s2] sm:$0xf]
    %v199 = vld [vmem:[%s2 + $0x4] sm:$0xf]
    %v200 = vld [vmem:[%s2 + $0x8] sm:$0xf]
    %v201 = vld [vmem:[%s2 + $0xc] sm:$0xf]
    %v202 = vpack.c.bf16 %v191, %v190
    %v203 = vpack.c.bf16 %v193, %v192
    %v204 = vpack.c.bf16 %v195, %v194
    %v205 = vpack.c.bf16 %v197, %v196
    %206 = vset.pattern.permute.xlu0 1
    %207 = vperm.xlu0 %206, %v19
    %v208 = vpop.permute.xlu0 %207
    %210 = vset.pattern.permute.xlu0 1
    %211 = vperm.xlu0 %210, %v20
    %v212 = vpop.permute.xlu0 %211
    %214 = vset.pattern.permute.xlu0 1
    %215 = vperm.xlu0 %214, %v21
    %v216 = vpop.permute.xlu0 %215
    %218 = vset.pattern.permute.xlu0 1
    %219 = vperm.xlu0 %218, %v22
    %v220 = vpop.permute.xlu0 %219
    %v226 = vunpack.c.l.b16 %v198
    %v227 = vunpack.c.l.b16 %v199
    %v228 = vunpack.c.l.b16 %v200
    %v229 = vunpack.c.l.b16 %v201
    %v230 = vpack.c.b16 %v227, %v226
    %v231 = vpack.c.b16 %v229, %v228
    %vm232 = vcmask 523264
    %v234 = vsel %vm232, %v230, 0
    %v237 = vsel %vm232, %v231, 0
    %239 = vmatprep.subr.bf16.mxu0 0
    %240 = vmatpush1.bf16.msra.mxu0 %v202
    %241 = vmatprep.subr.bf16.mxu0 0
    %242 = vmatpush1.bf16.msra.mxu0 %v203
    %243 = vmatprep.subr.bf16.mxu0 0
    %244 = vmatpush1.bf16.msra.mxu0 %v204
    %245 = vmatprep.subr.bf16.mxu0 0
    %246 = vmatpush1.bf16.msra.mxu0 %v205
    %247 = vmatprep.subr.bf16.mxu0 0
    %248 = vmatpush1.bf16.msra.mxu0 0
    %249 = vmatprep.subr.bf16.mxu0 0
    %250 = vmatpush1.bf16.msra.mxu0 0
    %251 = vmatprep.subr.bf16.mxu0 0
    %252 = vmatpush1.bf16.msra.mxu0 0
    %253 = vmatprep.subr.bf16.mxu0 0
    %254 = vmatpush1.bf16.msra.mxu0 0
    %255 = vmatprep.subr.bf16.mxu0 0
    %256 = vmatpush1.bf16.msra.mxu0 0
    %257 = vmatprep.subr.bf16.mxu0 0
    %258 = vmatpush1.bf16.msra.mxu0 0
    %259 = vmatprep.subr.bf16.mxu0 0
    %260 = vmatpush1.bf16.msra.mxu0 0
    %261 = vmatprep.subr.bf16.mxu0 0
    %262 = vmatpush1.bf16.msra.mxu0 0
    %263 = vmatprep.subr.bf16.mxu0 0
    %264 = vmatpush1.bf16.msra.mxu0 0
    %265 = vmatprep.subr.bf16.mxu0 0
    %266 = vmatpush1.bf16.msra.mxu0 0
    %267 = vmatprep.subr.bf16.mxu0 0
    %268 = vmatpush1.bf16.msra.mxu0 0
    %269 = vmatprep.subr.bf16.mxu0 0
    %270 = vmatpush1.bf16.msra.mxu0 0
    %271 = vmatprep.mubr.bf16.mxu0 0
    %272 = vmatmul.mubr.bf16.gmra.mrb[0].mxu0 %v234
    %v273 = vpop.f32.mrb[0].mxu0
    %v274 = vadd.f32 %v208, %v273
    %v275 = vpop.f32.mrb[0].mxu0
    %v276 = vpop.f32.mrb[0].mxu0
    %v277 = vadd.f32 %v212, %v276
    %v278 = vpop.f32.mrb[0].mxu0
    %279 = vmatprep.mubr.bf16.mxu0 0
    %280 = vmatmul.mubr.bf16.gmra.mrb[0].mxu0 %v237
    %v281 = vpop.f32.mrb[0].mxu0
    %v282 = vadd.f32 %v216, %v281
    %v283 = vpop.f32.mrb[0].mxu0
    %v284 = vpop.f32.mrb[0].mxu0
    %v285 = vadd.f32 %v220, %v284
    %v286 = vpop.f32.mrb[0].mxu0
    %287 = vdwg.mxu0
    %v288 = vmax.f32 %v274, 0.0
    %v289 = vmax.f32 %v277, 0.0
    %v290 = vmax.f32 %v282, 0.0
    %v291 = vmax.f32 %v285, 0.0
    %292 = vset.pattern.permute.xlu0 2
    %293 = vperm.xlu0 %292, %v19
    %v294 = vpop.permute.xlu0 %293
    %296 = vset.pattern.permute.xlu0 2
    %297 = vperm.xlu0 %296, %v20
    %v298 = vpop.permute.xlu0 %297
    %300 = vset.pattern.permute.xlu0 2
    %301 = vperm.xlu0 %300, %v21
    %v302 = vpop.permute.xlu0 %301
    %304 = vset.pattern.permute.xlu0 2
    %305 = vperm.xlu0 %304, %v22
    %v306 = vpop.permute.xlu0 %305
    %v308 = vmul.f32 %v288, %v294
    %v309 = vmul.f32 %v289, %v298
    %v310 = vmul.f32 %v290, %v302
    %v311 = vmul.f32 %v291, %v306
    %vm312 = vcmask 64512
    %v313 = vsel %vm312, %v308, 0.0
    %v314 = vsel %vm312, %v309, 0.0
    %v315 = vadd.f32 %v313, %v314
    %v316 = vsel %vm312, %v310, 0.0
    %v317 = vadd.f32 %v315, %v316
    %v318 = vsel %vm312, %v311, 0.0
    %v319 = vadd.f32 %v317, %v318
    %v320 = vrot.slane %v319, 4
    %v321 = vadd.f32 %v319, %v320
    %v322 = vrot.slane %v321, 2
    %v323 = vadd.f32 %v321, %v322
    %v324 = vrot.slane %v323, 1
    %v325 = vadd.f32 %v323, %v324
    %327 = vset.pattern.permute.xlu0 3
    %328 = vperm.xlu0 %327, %v27
    %v329 = vpop.permute.xlu0 %328
    %v331 = vadd.f32 %v325, %v329
    %vm332 = vcmask 57344
    %333 = vst.msk [vmem:[#allocation2] sm:$0x1] %vm332, %v331
    // Predicated region
    $region18: #{value_forward.1} parent=1 // pred_check
      _
    $region19: #{value_forward.1} parent=1 // pred_check_branch
      %335 = sbr.rel (0) target = $region21
    $region20: #{value_forward.1} parent=1 // pred_region
      %s337 = ssub.s32 16, 16
      %338 = vsyncadd [#allocation3], %s337
      %s340 = sshll.u32 [#allocation2], 4
      %s341 = int_to_ptr.vmem [resolvable:$true] %s340
      %343 = dma.vmem_to_hbm [thread:$0]  %s341, 16, %s4, [#allocation3]
    $region21: #{value_forward.1} parent=1 // pred_fallthru
      _
    // Predicated region
    $region22: #{value_forward.1} parent=1 // pred_check
      _
    $region23: #{value_forward.1} parent=1 // pred_check_branch
      %345 = sbr.rel (0) target = $region25
    $region24: #{value_forward.1} parent=1 // pred_region
      %346 = dma.done [#allocation3], 16
    $region25: #{value_forward.1} parent=1 // pred_fallthru
      _
    %347 = vsyncpa [#allocation3], 1

</llo_original>
